<compile_context>
chip_gen: v6e
topology: v6e:2x2x1
jax: 0.10.0
libtpu: 0.0.40
codegen_flags: <defaults>
</compile_context>

<pallas_src>
import functools
import math

import jax
import jax.numpy as jnp
from jax.experimental import pallas as pl
from jax.experimental.pallas import tpu as pltpu


def _weighted_loss_kernel(vf_ref, sf_ref, w1v_ref, w1s_ref, w1u_ref, b1_ref,
                          w2_ref, b2_ref, losses_ref, out_ref,
                          vf_sum, vf_sq, sf_sum, sf_sq,
                          *, seq_len, seq_tile):
    """Fused uncertainty-weighted loss.

    Grid axis 0 tiles the sequence dimension (cdiv grid; the last tile may be
    partial and is masked).  Per step: accumulate per-(batch, feature) sum and
    sum-of-squares into VMEM scratch.  Last step: finish the statistics, run
    the 2-layer weight predictor + softmax and write the weighted scalar loss
    into out_ref[(1, 1)].
    """
    k = pl.program_id(0)
    nsteps = pl.num_programs(0)

    @pl.when(k == 0)
    def _init():
        vf_sum[...] = jnp.zeros_like(vf_sum)
        vf_sq[...] = jnp.zeros_like(vf_sq)
        sf_sum[...] = jnp.zeros_like(sf_sum)
        sf_sq[...] = jnp.zeros_like(sf_sq)

    def _accumulate(vf, sf):
        # Sublane (XLU) reduction over the seq axis of this tile; overlaps with
        # the VPU cast/square work in the steady-state loop.
        vf_sum[...] += jnp.sum(vf, axis=1)            # [B, D]
        vf_sq[...] += jnp.sum(vf * vf, axis=1)
        sf_sum[...] += jnp.sum(sf, axis=1)
        sf_sq[...] += jnp.sum(sf * sf, axis=1)

    rem = seq_len % seq_tile                          # static Python int
    if rem == 0:
        # Every tile is full: no masking cost in the steady-state loop.
        _accumulate(vf_ref[...].astype(jnp.float32),
                    sf_ref[...].astype(jnp.float32))
    else:
        @pl.when(k < nsteps - 1)
        def _full_tile():
            _accumulate(vf_ref[...].astype(jnp.float32),
                        sf_ref[...].astype(jnp.float32))

        @pl.when(k == nsteps - 1)
        def _tail_tile():
            # Mask the out-of-range sublanes of the last (partial) tile.
            seq_idx = jax.lax.broadcasted_iota(jnp.int32, (1, seq_tile, 1), 1)
            valid = seq_idx < rem
            vf = jnp.where(valid, vf_ref[...].astype(jnp.float32), 0.0)
            sf = jnp.where(valid, sf_ref[...].astype(jnp.float32), 0.0)
            _accumulate(vf, sf)

    @pl.when(k == nsteps - 1)
    def _finalize():
        s = jnp.float32(seq_len)
        vf_mean = vf_sum[...] / s                               # [B, D]
        sf_mean = sf_sum[...] / s
        # torch.var(dim=1) is unbiased (ddof=1):
        #   sum((x-mean)^2) = sumsq - S*mean^2
        vf_var = (vf_sq[...] - s * vf_mean * vf_mean) / (s - 1.0)
        sf_var = (sf_sq[...] - s * sf_mean * sf_mean) / (s - 1.0)
        vu = jnp.mean(vf_var, axis=1, keepdims=True)            # [B, 1]
        su = jnp.mean(sf_var, axis=1, keepdims=True)

        # Linear(2D+2 -> H) applied to concat([vf_mean, sf_mean, vu, su]),
        # expressed as a sum of partial matmuls (W1 was split in the wrapper),
        # so the concat is never materialized in-kernel.
        w1u = w1u_ref[...]                                      # [2, H]
        h = (jnp.dot(vf_mean, w1v_ref[...], preferred_element_type=jnp.float32)
             + jnp.dot(sf_mean, w1s_ref[...], preferred_element_type=jnp.float32)
             + vu * w1u[0:1, :]
             + su * w1u[1:2, :]
             + b1_ref[...])                                     # [B, H]
        h = jnp.maximum(h, 0.0)                                 # ReLU

        logits = (jnp.dot(h, w2_ref[...], preferred_element_type=jnp.float32)
                  + b2_ref[...])                                # [B, 4]
        m = jnp.max(logits, axis=-1, keepdims=True)
        e = jnp.exp(logits - m)
        probs = e / jnp.sum(e, axis=-1, keepdims=True)          # softmax, [B, 4]
        w_mean = jnp.mean(probs, axis=0, keepdims=True)         # [1, 4]

        out_ref[...] = jnp.sum(w_mean * losses_ref[...], axis=1, keepdims=True)


def _vmem_budget_bytes() -> int:
    """Scoped-VMEM budget derived from the actual chip (v7x has only 64 MiB)."""
    try:
        cap = int(pltpu.get_tpu_info().vmem_capacity_bytes)
    except Exception:
        cap = 64 << 20          # conservative fallback (v7x per-TC VMEM)
    return min((cap * 3) // 4, 96 << 20)


def _pick_seq_tile(batch: int, seq_len: int, d_model: int,
                   dtype_bytes: int, vmem_budget: int) -> int:
    """Largest seq tile that keeps 2 feature inputs x 2 pipeline buffers inside
    the VMEM budget (with headroom for the resident weight blocks, the f32
    scratch accumulators and compiler-internal scratch), capped at 2048 where
    per-step grid overhead is already fully amortized.  Multiple of 16 so both
    f32 (8-sublane) and bf16 (16-sublane) tilings are legal."""
    reserve = 6 << 20
    feat_budget = max(vmem_budget - reserve, 2 << 20)
    per_seq_row = 4 * batch * d_model * dtype_bytes   # 2 inputs x 2 buffers
    ts = feat_budget // max(per_seq_row, 1)
    ts = min(int(ts), 2048)
    ts = (ts // 16) * 16
    ts = max(ts, 16)
    if ts >= seq_len:
        return seq_len          # single full-axis block (exempt from tiling rule)
    return ts


def _uncertainty_weighted_loss_pallas(losses_vec, visual_features,
                                      structural_features, params,
                                      seq_tile=None):
    vf = visual_features        # native dtype (e.g. bf16) -- no wrapper upcast
    sf = structural_features
    B, S, D = vf.shape
    assert sf.shape == (B, S, D), "feature tensors must have the same shape"

    W1, b1, W2, b2 = params
    H = W1.shape[1]
    assert W1.shape[0] == 2 * D + 2, "Linear in-dim must equal 2*d_model + 2"

    # Split W1 so the concat in the reference becomes a sum of partial matmuls.
    w1v = W1[:D].astype(jnp.float32)               # rows for visual mean features
    w1s = W1[D:2 * D].astype(jnp.float32)          # rows for structural mean features
    w1u = W1[2 * D:2 * D + 2].astype(jnp.float32)  # rows for the two uncertainties
    b1_2d = b1.reshape(1, H).astype(jnp.float32)
    w2f = W2.astype(jnp.float32)
    b2_2d = b2.reshape(1, 4).astype(jnp.float32)
    losses_2d = losses_vec.reshape(1, 4).astype(jnp.float32)

    vmem_budget = _vmem_budget_bytes()
    dtype_bytes = jnp.dtype(vf.dtype).itemsize
    ts = seq_tile if seq_tile is not None else _pick_seq_tile(
        B, S, D, dtype_bytes, vmem_budget)
    ts = min(int(ts), S)
    grid = (pl.cdiv(S, ts),)

    kernel = functools.partial(_weighted_loss_kernel, seq_len=S, seq_tile=ts)

    out = pl.pallas_call(
        kernel,
        out_shape=jax.ShapeDtypeStruct((1, 1), jnp.float32),
        grid_spec=pltpu.PrefetchScalarGridSpec(
            num_scalar_prefetch=0,
            grid=grid,
            in_specs=[
                pl.BlockSpec((B, ts, D), lambda k: (0, k, 0)),   # visual feats
                pl.BlockSpec((B, ts, D), lambda k: (0, k, 0)),   # structural feats
                pl.BlockSpec((D, H), lambda k: (0, 0)),          # W1[:D]
                pl.BlockSpec((D, H), lambda k: (0, 0)),          # W1[D:2D]
                pl.BlockSpec((2, H), lambda k: (0, 0)),          # W1[2D:2D+2]
                pl.BlockSpec((1, H), lambda k: (0, 0)),          # b1
                pl.BlockSpec((H, 4), lambda k: (0, 0)),          # W2
                pl.BlockSpec((1, 4), lambda k: (0, 0)),          # b2
                pl.BlockSpec((1, 4), lambda k: (0, 0)),          # losses
            ],
            # Same output block every step -> resident; only written last step.
            out_specs=pl.BlockSpec((1, 1), lambda k: (0, 0)),
            scratch_shapes=[pltpu.VMEM((B, D), jnp.float32)] * 4,
        ),
        compiler_params=pltpu.CompilerParams(
            dimension_semantics=("arbitrary",),
            vmem_limit_bytes=int(vmem_budget),
        ),
    )(vf, sf, w1v, w1s, w1u, b1_2d, w2f, b2_2d, losses_2d)
    return out[0, 0]


def modality_aware_loss_weighting(visual_loss, structural_loss, geometric_loss,
                                  aesthetic_loss=None,
                                  visual_features=None,
                                  structural_features=None, *,
                                  params=None,
                                  uncertainty_based=True,
                                  visual_weight=0.4, structural_weight=0.4,
                                  geometric_weight=0.2, aesthetic_weight=0.0,
                                  seq_tile=None):
    """JAX/Pallas equivalent of ModalityAwareLossWeighting.forward."""
    use_uncertainty = (uncertainty_based and params is not None
                       and visual_features is not None
                       and structural_features is not None)
    if use_uncertainty:
        al = (jnp.float32(0.0) if aesthetic_loss is None
              else jnp.asarray(aesthetic_loss, jnp.float32))
        losses_vec = jnp.stack([jnp.asarray(visual_loss, jnp.float32),
                                jnp.asarray(structural_loss, jnp.float32),
                                jnp.asarray(geometric_loss, jnp.float32),
                                al])
        return _uncertainty_weighted_loss_pallas(
            losses_vec, visual_features, structural_features, params,
            seq_tile=seq_tile)

    # Fixed-weight branch: 4 scalar ops -> pure JAX (a Pallas kernel would be
    # pure launch overhead for this path).
    total = (visual_weight * visual_loss
             + structural_weight * structural_loss
             + geometric_weight * geometric_loss)
    if aesthetic_loss is not None:
        total = total + aesthetic_weight * aesthetic_loss
    return total


def _reference_loss(visual_loss, structural_loss, geometric_loss, aesthetic_loss,
                    visual_features, structural_features, params):
    """Pure-JAX reference mirroring the PyTorch module (for verification)."""
    W1, b1, W2, b2 = params
    vf = visual_features.astype(jnp.float32)
    sf = structural_features.astype(jnp.float32)
    vu = jnp.var(vf, axis=1, ddof=1).mean(axis=1)     # [B]
    su = jnp.var(sf, axis=1, ddof=1).mean(axis=1)     # [B]
    feats = jnp.concatenate(
        [vf.mean(axis=1), sf.mean(axis=1), vu[:, None], su[:, None]], axis=-1)
    h = jnp.maximum(feats @ W1 + b1, 0.0)
    logits = h @ W2 + b2
    w = jax.nn.softmax(logits, axis=-1).mean(axis=0)  # [4]
    total = w[0] * visual_loss + w[1] * structural_loss + w[2] * geometric_loss
    if aesthetic_loss is not None:
        total = total + w[3] * aesthetic_loss
    return total


if __name__ == "__main__":
    # Shapes consistent with the module: Linear(512, 256) requires the
    # uncertainty feature vector 2*d_model + 2 == 512 -> d_model = 255.
    batch, seq, d_model, hidden = 2, 8, 255, 256
    in_dim = 2 * d_model + 2                      # == 512

    key = jax.random.PRNGKey(0)
    k_vf, k_sf, k_w1, k_b1, k_w2, k_b2, k_loss, k_vf2, k_sf2 = jax.random.split(key, 9)

    visual_features = jax.random.normal(k_vf, (batch, seq, d_model), jnp.float32)
    structural_features = jax.random.normal(k_sf, (batch, seq, d_model), jnp.float32)

    lim1 = 1.0 / math.sqrt(in_dim)
    lim2 = 1.0 / math.sqrt(hidden)
    W1 = jax.random.uniform(k_w1, (in_dim, hidden), jnp.float32, -lim1, lim1)
    b1 = jax.random.uniform(k_b1, (hidden,), jnp.float32, -lim1, lim1)
    W2 = jax.random.uniform(k_w2, (hidden, 4), jnp.float32, -lim2, lim2)
    b2 = jax.random.uniform(k_b2, (4,), jnp.float32, -lim2, lim2)
    params = (W1, b1, W2, b2)

    losses = jax.random.uniform(k_loss, (4,), jnp.float32, 0.1, 1.0)
    visual_loss, structural_loss, geometric_loss, aesthetic_loss = (
        losses[0], losses[1], losses[2], losses[3])

    # --- Test 1: uncertainty path, f32 features, single full-axis block. ---
    out = modality_aware_loss_weighting(
        visual_loss, structural_loss, geometric_loss, aesthetic_loss,
        visual_features, structural_features, params=params)
    out = jax.block_until_ready(out)
    ref = jax.block_until_ready(_reference_loss(
        visual_loss, structural_loss, geometric_loss, aesthetic_loss,
        visual_features, structural_features, params))
    # Tolerance covers MXU default-precision f32 matmul vs XLA's dot.
    assert jnp.allclose(out, ref, rtol=5e-3, atol=5e-3), (out, ref)

    # --- Test 2: bf16 features, S not a multiple of the tile -> exercises the
    # native-dtype streaming path plus the masked tail tile (seq_tile forced
    # small so the multi-step + remainder path runs at small shapes). ---
    seq2 = 40
    vf_bf16 = jax.random.normal(k_vf2, (batch, seq2, d_model), jnp.float32).astype(jnp.bfloat16)
    sf_bf16 = jax.random.normal(k_sf2, (batch, seq2, d_model), jnp.float32).astype(jnp.bfloat16)
    out2 = modality_aware_loss_weighting(
        visual_loss, structural_loss, geometric_loss, aesthetic_loss,
        vf_bf16, sf_bf16, params=params, seq_tile=16)
    out2 = jax.block_until_ready(out2)
    ref2 = jax.block_until_ready(_reference_loss(
        visual_loss, structural_loss, geometric_loss, aesthetic_loss,
        vf_bf16, sf_bf16, params))
    assert jnp.allclose(out2, ref2, rtol=1e-2, atol=1e-2), (out2, ref2)

    # --- Test 3: fixed-weight path (no features) -> pure scalar math. ---
    fixed = modality_aware_loss_weighting(
        visual_loss, structural_loss, geometric_loss, aesthetic_loss,
        uncertainty_based=False)
    fixed_ref = (0.4 * visual_loss + 0.4 * structural_loss
                 + 0.2 * geometric_loss + 0.0 * aesthetic_loss)
    assert jnp.allclose(fixed, fixed_ref, rtol=1e-6, atol=1e-6), (fixed, fixed_ref)

    print("KERNEL_OK")
</pallas_src>

<mosaic_0001>
module attributes {stable_mosaic.version = 11 : i64} {
  func.func @_weighted_loss_kernel(%arg0: i32, %arg1: memref<2x8x255xf32, #tpu.memory_space<vmem>>, %arg2: memref<2x8x255xf32, #tpu.memory_space<vmem>>, %arg3: memref<255x256xf32, #tpu.memory_space<vmem>>, %arg4: memref<255x256xf32, #tpu.memory_space<vmem>>, %arg5: memref<2x256xf32, #tpu.memory_space<vmem>>, %arg6: memref<1x256xf32, #tpu.memory_space<vmem>>, %arg7: memref<256x4xf32, #tpu.memory_space<vmem>>, %arg8: memref<1x4xf32, #tpu.memory_space<vmem>>, %arg9: memref<1x4xf32, #tpu.memory_space<vmem>>, %arg10: memref<1x1xf32, #tpu.memory_space<vmem>>, %arg11: memref<2x255xf32, #tpu.memory_space<vmem>>, %arg12: memref<2x255xf32, #tpu.memory_space<vmem>>, %arg13: memref<2x255xf32, #tpu.memory_space<vmem>>, %arg14: memref<2x255xf32, #tpu.memory_space<vmem>>) attributes {dimension_semantics = [#tpu.dimension_semantics<arbitrary>], iteration_bounds = array<i64: 1>, scalar_prefetch = 0 : i64, scratch_operands = 4 : i64, tpu.core_type = #tpu.core_type<tc>, window_params = [{transform_indices = @transform_0, window_bounds = array<i64: 2, 8, 255>}, {transform_indices = @transform_1, window_bounds = array<i64: 2, 8, 255>}, {pipeline_mode = #tpu.pipeline_mode<synchronous>, transform_indices = @transform_2, window_bounds = array<i64: 255, 256>}, {pipeline_mode = #tpu.pipeline_mode<synchronous>, transform_indices = @transform_3, window_bounds = array<i64: 255, 256>}, {pipeline_mode = #tpu.pipeline_mode<synchronous>, transform_indices = @transform_4, window_bounds = array<i64: 2, 256>}, {pipeline_mode = #tpu.pipeline_mode<synchronous>, transform_indices = @transform_5, window_bounds = array<i64: 1, 256>}, {pipeline_mode = #tpu.pipeline_mode<synchronous>, transform_indices = @transform_6, window_bounds = array<i64: 256, 4>}, {pipeline_mode = #tpu.pipeline_mode<synchronous>, transform_indices = @transform_7, window_bounds = array<i64: 1, 4>}, {pipeline_mode = #tpu.pipeline_mode<synchronous>, transform_indices = @transform_8, window_bounds = array<i64: 1, 4>}, {pipeline_mode = #tpu.pipeline_mode<synchronous>, transform_indices = @transform_9, window_bounds = array<i64: 1, 1>}]} {
    %c0_i32 = arith.constant 0 : i32
    %0 = arith.cmpi eq, %arg0, %c0_i32 : i32
    %1 = arith.extui %0 : i1 to i32
    %c0_i32_0 = arith.constant 0 : i32
    %2 = arith.cmpi ne, %1, %c0_i32_0 : i32
    scf.if %2 {
      %cst_27 = arith.constant 0.000000e+00 : f32
      %26 = vector.broadcast %cst_27 : f32 to vector<2x255xf32>
      %c0_28 = arith.constant 0 : index
      %c0_29 = arith.constant 0 : index
      %27 = vector.load %arg11[%c0_28, %c0_29] : memref<2x255xf32, #tpu.memory_space<vmem>>, vector<2x255xf32>
      tpu.vector_store %arg11[%c0_28, %c0_29], %26 {strides = array<i32>} : memref<2x255xf32, #tpu.memory_space<vmem>>, vector<2x255xf32>,
      %cst_30 = arith.constant 0.000000e+00 : f32
      %28 = vector.broadcast %cst_30 : f32 to vector<2x255xf32>
      %c0_31 = arith.constant 0 : index
      %c0_32 = arith.constant 0 : index
      %29 = vector.load %arg12[%c0_31, %c0_32] : memref<2x255xf32, #tpu.memory_space<vmem>>, vector<2x255xf32>
      tpu.vector_store %arg12[%c0_31, %c0_32], %28 {strides = array<i32>} : memref<2x255xf32, #tpu.memory_space<vmem>>, vector<2x255xf32>,
      %cst_33 = arith.constant 0.000000e+00 : f32
      %30 = vector.broadcast %cst_33 : f32 to vector<2x255xf32>
      %c0_34 = arith.constant 0 : index
      %c0_35 = arith.constant 0 : index
      %31 = vector.load %arg13[%c0_34, %c0_35] : memref<2x255xf32, #tpu.memory_space<vmem>>, vector<2x255xf32>
      tpu.vector_store %arg13[%c0_34, %c0_35], %30 {strides = array<i32>} : memref<2x255xf32, #tpu.memory_space<vmem>>, vector<2x255xf32>,
      %cst_36 = arith.constant 0.000000e+00 : f32
      %32 = vector.broadcast %cst_36 : f32 to vector<2x255xf32>
      %c0_37 = arith.constant 0 : index
      %c0_38 = arith.constant 0 : index
      %33 = vector.load %arg14[%c0_37, %c0_38] : memref<2x255xf32, #tpu.memory_space<vmem>>, vector<2x255xf32>
      tpu.vector_store %arg14[%c0_37, %c0_38], %32 {strides = array<i32>} : memref<2x255xf32, #tpu.memory_space<vmem>>, vector<2x255xf32>,
    } else {
    }
    %c0 = arith.constant 0 : index
    %c0_1 = arith.constant 0 : index
    %c0_2 = arith.constant 0 : index
    %3 = vector.load %arg1[%c0, %c0_1, %c0_2] : memref<2x8x255xf32, #tpu.memory_space<vmem>>, vector<2x8x255xf32>
    %c0_3 = arith.constant 0 : index
    %c0_4 = arith.constant 0 : index
    %c0_5 = arith.constant 0 : index
    %4 = vector.load %arg2[%c0_3, %c0_4, %c0_5] : memref<2x8x255xf32, #tpu.memory_space<vmem>>, vector<2x8x255xf32>
    %c0_6 = arith.constant 0 : index
    %c0_7 = arith.constant 0 : index
    %5 = vector.load %arg11[%c0_6, %c0_7] : memref<2x255xf32, #tpu.memory_space<vmem>>, vector<2x255xf32>
    %cst = arith.constant dense<0.000000e+00> : vector<2x255xf32>
    %6 = vector.multi_reduction <add>, %3, %cst [1] : vector<2x8x255xf32> to vector<2x255xf32>
    %7 = arith.addf %5, %6 : vector<2x255xf32>
    %c0_8 = arith.constant 0 : index
    %c0_9 = arith.constant 0 : index
    %8 = vector.load %arg11[%c0_8, %c0_9] : memref<2x255xf32, #tpu.memory_space<vmem>>, vector<2x255xf32>
    tpu.vector_store %arg11[%c0_8, %c0_9], %7 {strides = array<i32>} : memref<2x255xf32, #tpu.memory_space<vmem>>, vector<2x255xf32>,
    %c0_10 = arith.constant 0 : index
    %c0_11 = arith.constant 0 : index
    %9 = vector.load %arg12[%c0_10, %c0_11] : memref<2x255xf32, #tpu.memory_space<vmem>>, vector<2x255xf32>
    %10 = arith.mulf %3, %3 : vector<2x8x255xf32>
    %cst_12 = arith.constant dense<0.000000e+00> : vector<2x255xf32>
    %11 = vector.multi_reduction <add>, %10, %cst_12 [1] : vector<2x8x255xf32> to vector<2x255xf32>
    %12 = arith.addf %9, %11 : vector<2x255xf32>
    %c0_13 = arith.constant 0 : index
    %c0_14 = arith.constant 0 : index
    %13 = vector.load %arg12[%c0_13, %c0_14] : memref<2x255xf32, #tpu.memory_space<vmem>>, vector<2x255xf32>
    tpu.vector_store %arg12[%c0_13, %c0_14], %12 {strides = array<i32>} : memref<2x255xf32, #tpu.memory_space<vmem>>, vector<2x255xf32>,
    %c0_15 = arith.constant 0 : index
    %c0_16 = arith.constant 0 : index
    %14 = vector.load %arg13[%c0_15, %c0_16] : memref<2x255xf32, #tpu.memory_space<vmem>>, vector<2x255xf32>
    %cst_17 = arith.constant dense<0.000000e+00> : vector<2x255xf32>
    %15 = vector.multi_reduction <add>, %4, %cst_17 [1] : vector<2x8x255xf32> to vector<2x255xf32>
    %16 = arith.addf %14, %15 : vector<2x255xf32>
    %c0_18 = arith.constant 0 : index
    %c0_19 = arith.constant 0 : index
    %17 = vector.load %arg13[%c0_18, %c0_19] : memref<2x255xf32, #tpu.memory_space<vmem>>, vector<2x255xf32>
    tpu.vector_store %arg13[%c0_18, %c0_19], %16 {strides = array<i32>} : memref<2x255xf32, #tpu.memory_space<vmem>>, vector<2x255xf32>,
    %c0_20 = arith.constant 0 : index
    %c0_21 = arith.constant 0 : index
    %18 = vector.load %arg14[%c0_20, %c0_21] : memref<2x255xf32, #tpu.memory_space<vmem>>, vector<2x255xf32>
    %19 = arith.mulf %4, %4 : vector<2x8x255xf32>
    %cst_22 = arith.constant dense<0.000000e+00> : vector<2x255xf32>
    %20 = vector.multi_reduction <add>, %19, %cst_22 [1] : vector<2x8x255xf32> to vector<2x255xf32>
    %21 = arith.addf %18, %20 : vector<2x255xf32>
    %c0_23 = arith.constant 0 : index
    %c0_24 = arith.constant 0 : index
    %22 = vector.load %arg14[%c0_23, %c0_24] : memref<2x255xf32, #tpu.memory_space<vmem>>, vector<2x255xf32>
    tpu.vector_store %arg14[%c0_23, %c0_24], %21 {strides = array<i32>} : memref<2x255xf32, #tpu.memory_space<vmem>>, vector<2x255xf32>,
    %c0_i32_25 = arith.constant 0 : i32
    %23 = arith.cmpi eq, %arg0, %c0_i32_25 : i32
    %24 = arith.extui %23 : i1 to i32
    %c0_i32_26 = arith.constant 0 : i32
    %25 = arith.cmpi ne, %24, %c0_i32_26 : i32
    scf.if %25 {
      %c0_27 = arith.constant 0 : index
      %c0_28 = arith.constant 0 : index
      %26 = vector.load %arg11[%c0_27, %c0_28] : memref<2x255xf32, #tpu.memory_space<vmem>>, vector<2x255xf32>
      %cst_29 = arith.constant 8.000000e+00 : f32
      %27 = vector.broadcast %cst_29 : f32 to vector<2x255xf32>
      %28 = arith.divf %26, %27 : vector<2x255xf32>
      %c0_30 = arith.constant 0 : index
      %c0_31 = arith.constant 0 : index
      %29 = vector.load %arg13[%c0_30, %c0_31] : memref<2x255xf32, #tpu.memory_space<vmem>>, vector<2x255xf32>
      %cst_32 = arith.constant 8.000000e+00 : f32
      %30 = vector.broadcast %cst_32 : f32 to vector<2x255xf32>
      %31 = arith.divf %29, %30 : vector<2x255xf32>
      %c0_33 = arith.constant 0 : index
      %c0_34 = arith.constant 0 : index
      %32 = vector.load %arg12[%c0_33, %c0_34] : memref<2x255xf32, #tpu.memory_space<vmem>>, vector<2x255xf32>
      %cst_35 = arith.constant 8.000000e+00 : f32
      %33 = vector.broadcast %cst_35 : f32 to vector<2x255xf32>
      %34 = arith.mulf %33, %28 : vector<2x255xf32>
      %35 = arith.mulf %34, %28 : vector<2x255xf32>
      %36 = arith.subf %32, %35 : vector<2x255xf32>
      %cst_36 = arith.constant 8.000000e+00 : f32
      %cst_37 = arith.constant 1.000000e+00 : f32
      %37 = arith.subf %cst_36, %cst_37 : f32
      %38 = vector.broadcast %37 : f32 to vector<2x255xf32>
      %39 = arith.divf %36, %38 : vector<2x255xf32>
      %c0_38 = arith.constant 0 : index
      %c0_39 = arith.constant 0 : index
      %40 = vector.load %arg14[%c0_38, %c0_39] : memref<2x255xf32, #tpu.memory_space<vmem>>, vector<2x255xf32>
      %cst_40 = arith.constant 8.000000e+00 : f32
      %41 = vector.broadcast %cst_40 : f32 to vector<2x255xf32>
      %42 = arith.mulf %41, %31 : vector<2x255xf32>
      %43 = arith.mulf %42, %31 : vector<2x255xf32>
      %44 = arith.subf %40, %43 : vector<2x255xf32>
      %cst_41 = arith.constant 8.000000e+00 : f32
      %cst_42 = arith.constant 1.000000e+00 : f32
      %45 = arith.subf %cst_41, %cst_42 : f32
      %46 = vector.broadcast %45 : f32 to vector<2x255xf32>
      %47 = arith.divf %44, %46 : vector<2x255xf32>
      %cst_43 = arith.constant dense<0.000000e+00> : vector<2xf32>
      %48 = vector.multi_reduction <add>, %39, %cst_43 [1] : vector<2x255xf32> to vector<2xf32>
      %49 = vector.shape_cast %48 : vector<2xf32> to vector<2x1xf32>
      %cst_44 = arith.constant 2.550000e+02 : f32
      %50 = vector.broadcast %cst_44 : f32 to vector<2x1xf32>
      %51 = arith.divf %49, %50 : vector<2x1xf32>
      %cst_45 = arith.constant dense<0.000000e+00> : vector<2xf32>
      %52 = vector.multi_reduction <add>, %47, %cst_45 [1] : vector<2x255xf32> to vector<2xf32>
      %53 = vector.shape_cast %52 : vector<2xf32> to vector<2x1xf32>
      %cst_46 = arith.constant 2.550000e+02 : f32
      %54 = vector.broadcast %cst_46 : f32 to vector<2x1xf32>
      %55 = arith.divf %53, %54 : vector<2x1xf32>
      %c0_47 = arith.constant 0 : index
      %c0_48 = arith.constant 0 : index
      %56 = vector.load %arg5[%c0_47, %c0_48] : memref<2x256xf32, #tpu.memory_space<vmem>>, vector<2x256xf32>
      %c0_49 = arith.constant 0 : index
      %c0_50 = arith.constant 0 : index
      %57 = vector.load %arg3[%c0_49, %c0_50] : memref<255x256xf32, #tpu.memory_space<vmem>>, vector<255x256xf32>
      %cst_51 = arith.constant dense<0.000000e+00> : vector<2x256xf32>
      %58 = tpu.matmul %28, %57, %cst_51 {dimension_numbers = #tpu.dot_dimension_numbers<[1], [0], [0], [1], [0, 0, 1, 1], [], []>} : vector<2x255xf32>, vector<255x256xf32>, vector<2x256xf32> -> vector<2x256xf32>
      %c0_52 = arith.constant 0 : index
      %c0_53 = arith.constant 0 : index
      %59 = vector.load %arg4[%c0_52, %c0_53] : memref<255x256xf32, #tpu.memory_space<vmem>>, vector<255x256xf32>
      %cst_54 = arith.constant dense<0.000000e+00> : vector<2x256xf32>
      %60 = tpu.matmul %31, %59, %cst_54 {dimension_numbers = #tpu.dot_dimension_numbers<[1], [0], [0], [1], [0, 0, 1, 1], [], []>} : vector<2x255xf32>, vector<255x256xf32>, vector<2x256xf32> -> vector<2x256xf32>
      %61 = arith.addf %58, %60 : vector<2x256xf32>
      %62 = vector.extract_strided_slice %56 {offsets = [0, 0], sizes = [1, 256], strides = [1, 1]} : vector<2x256xf32> to vector<1x256xf32>
      %63 = vector.broadcast %51 : vector<2x1xf32> to vector<2x256xf32>
      %64 = vector.broadcast %62 : vector<1x256xf32> to vector<2x256xf32>
      %65 = arith.mulf %63, %64 : vector<2x256xf32>
      %66 = arith.addf %61, %65 : vector<2x256xf32>
      %67 = vector.extract_strided_slice %56 {offsets = [1, 0], sizes = [1, 256], strides = [1, 1]} : vector<2x256xf32> to vector<1x256xf32>
      %68 = vector.broadcast %55 : vector<2x1xf32> to vector<2x256xf32>
      %69 = vector.broadcast %67 : vector<1x256xf32> to vector<2x256xf32>
      %70 = arith.mulf %68, %69 : vector<2x256xf32>
      %71 = arith.addf %66, %70 : vector<2x256xf32>
      %c0_55 = arith.constant 0 : index
      %c0_56 = arith.constant 0 : index
      %72 = vector.load %arg6[%c0_55, %c0_56] : memref<1x256xf32, #tpu.memory_space<vmem>>, vector<1x256xf32>
      %73 = vector.broadcast %72 : vector<1x256xf32> to vector<2x256xf32>
      %74 = arith.addf %71, %73 : vector<2x256xf32>
      %cst_57 = arith.constant 0.000000e+00 : f32
      %75 = vector.broadcast %cst_57 : f32 to vector<2x256xf32>
      %76 = arith.maximumf %74, %75 : vector<2x256xf32>
      %c0_58 = arith.constant 0 : index
      %c0_59 = arith.constant 0 : index
      %77 = vector.load %arg7[%c0_58, %c0_59] : memref<256x4xf32, #tpu.memory_space<vmem>>, vector<256x4xf32>
      %cst_60 = arith.constant dense<0.000000e+00> : vector<2x4xf32>
      %78 = tpu.matmul %76, %77, %cst_60 {dimension_numbers = #tpu.dot_dimension_numbers<[1], [0], [0], [1], [0, 0, 1, 1], [], []>} : vector<2x256xf32>, vector<256x4xf32>, vector<2x4xf32> -> vector<2x4xf32>
      %c0_61 = arith.constant 0 : index
      %c0_62 = arith.constant 0 : index
      %79 = vector.load %arg8[%c0_61, %c0_62] : memref<1x4xf32, #tpu.memory_space<vmem>>, vector<1x4xf32>
      %80 = vector.broadcast %79 : vector<1x4xf32> to vector<2x4xf32>
      %81 = arith.addf %78, %80 : vector<2x4xf32>
      %cst_63 = arith.constant dense<0xFF800000> : vector<2xf32>
      %82 = vector.multi_reduction <maximumf>, %81, %cst_63 [1] : vector<2x4xf32> to vector<2xf32>
      %83 = vector.shape_cast %82 : vector<2xf32> to vector<2x1xf32>
      %84 = vector.broadcast %83 : vector<2x1xf32> to vector<2x4xf32>
      %85 = arith.subf %81, %84 : vector<2x4xf32>
      %86 = math.exp %85 : vector<2x4xf32>
      %cst_64 = arith.constant dense<0.000000e+00> : vector<2xf32>
      %87 = vector.multi_reduction <add>, %86, %cst_64 [1] : vector<2x4xf32> to vector<2xf32>
      %88 = vector.shape_cast %87 : vector<2xf32> to vector<2x1xf32>
      %89 = vector.broadcast %88 : vector<2x1xf32> to vector<2x4xf32>
      %90 = arith.divf %86, %89 : vector<2x4xf32>
      %cst_65 = arith.constant dense<0.000000e+00> : vector<4xf32>
      %91 = vector.multi_reduction <add>, %90, %cst_65 [0] : vector<2x4xf32> to vector<4xf32>
      %92 = vector.shape_cast %91 : vector<4xf32> to vector<1x4xf32>
      %cst_66 = arith.constant 2.000000e+00 : f32
      %93 = vector.broadcast %cst_66 : f32 to vector<1x4xf32>
      %94 = arith.divf %92, %93 : vector<1x4xf32>
      %c0_67 = arith.constant 0 : index
      %c0_68 = arith.constant 0 : index
      %95 = vector.load %arg9[%c0_67, %c0_68] : memref<1x4xf32, #tpu.memory_space<vmem>>, vector<1x4xf32>
      %96 = arith.mulf %94, %95 : vector<1x4xf32>
      %cst_69 = arith.constant dense<0.000000e+00> : vector<1xf32>
      %97 = vector.multi_reduction <add>, %96, %cst_69 [1] : vector<1x4xf32> to vector<1xf32>
      %98 = vector.shape_cast %97 : vector<1xf32> to vector<1x1xf32>
      %c0_70 = arith.constant 0 : index
      %c0_71 = arith.constant 0 : index
      %99 = vector.load %arg10[%c0_70, %c0_71] : memref<1x1xf32, #tpu.memory_space<vmem>>, vector<1x1xf32>
      tpu.vector_store %arg10[%c0_70, %c0_71], %98 {strides = array<i32>} : memref<1x1xf32, #tpu.memory_space<vmem>>, vector<1x1xf32>,
    } else {
    }
    return
  }
  func.func @transform_0(%arg0: i32) -> (i32, i32, i32) {
    %c0_i32 = arith.constant 0 : i32
    %c0_i32_0 = arith.constant 0 : i32
    %c0_i32_1 = arith.constant 0 : i32
    return %c0_i32, %arg0, %c0_i32_0 : i32, i32, i32
  }
  func.func @transform_1(%arg0: i32) -> (i32, i32, i32) {
    %c0_i32 = arith.constant 0 : i32
    %c0_i32_0 = arith.constant 0 : i32
    %c0_i32_1 = arith.constant 0 : i32
    return %c0_i32, %arg0, %c0_i32_0 : i32, i32, i32
  }
  func.func @transform_2(%arg0: i32) -> (i32, i32) {
    %c0_i32 = arith.constant 0 : i32
    %c0_i32_0 = arith.constant 0 : i32
    %c0_i32_1 = arith.constant 0 : i32
    return %c0_i32, %c0_i32_0 : i32, i32
  }
  func.func @transform_3(%arg0: i32) -> (i32, i32) {
    %c0_i32 = arith.constant 0 : i32
    %c0_i32_0 = arith.constant 0 : i32
    %c0_i32_1 = arith.constant 0 : i32
    return %c0_i32, %c0_i32_0 : i32, i32
  }
  func.func @transform_4(%arg0: i32) -> (i32, i32) {
    %c0_i32 = arith.constant 0 : i32
    %c0_i32_0 = arith.constant 0 : i32
    %c0_i32_1 = arith.constant 0 : i32
    return %c0_i32, %c0_i32_0 : i32, i32
  }
  func.func @transform_5(%arg0: i32) -> (i32, i32) {
    %c0_i32 = arith.constant 0 : i32
    %c0_i32_0 = arith.constant 0 : i32
    %c0_i32_1 = arith.constant 0 : i32
    return %c0_i32, %c0_i32_0 : i32, i32
  }
  func.func @transform_6(%arg0: i32) -> (i32, i32) {
    %c0_i32 = arith.constant 0 : i32
    %c0_i32_0 = arith.constant 0 : i32
    %c0_i32_1 = arith.constant 0 : i32
    return %c0_i32, %c0_i32_0 : i32, i32
  }
  func.func @transform_7(%arg0: i32) -> (i32, i32) {
    %c0_i32 = arith.constant 0 : i32
    %c0_i32_0 = arith.constant 0 : i32
    %c0_i32_1 = arith.constant 0 : i32
    return %c0_i32, %c0_i32_0 : i32, i32
  }
  func.func @transform_8(%arg0: i32) -> (i32, i32) {
    %c0_i32 = arith.constant 0 : i32
    %c0_i32_0 = arith.constant 0 : i32
    %c0_i32_1 = arith.constant 0 : i32
    return %c0_i32, %c0_i32_0 : i32, i32
  }
  func.func @transform_9(%arg0: i32) -> (i32, i32) {
    %c0_i32 = arith.constant 0 : i32
    %c0_i32_0 = arith.constant 0 : i32
    %c0_i32_1 = arith.constant 0 : i32
    return %c0_i32, %c0_i32_0 : i32, i32
  }
}

</mosaic_0001>

<llo_original>
// kernel: tpu_custom_call.1
$region0: #{tpu_custom_call.1}
  #allocation0 [shape = 'u32[]', space=smem, size = 0x4, offset = 0x4, fixed_abs, tag = 'smem constant byte address 0x4 - core index']
  #allocation1 [shape = 'u32[144,128]{1,0:T(1,128)}', space=vmem, size = 0x12000, scoped, tag = 'internal scratch']
  #allocation2 [shape = 'f32[2,255]{1,0:T(2,128)}', space=vmem, size = 0x800, scoped, tag = 'scratch operand']
  #allocation3 [shape = 'f32[2,255]{1,0:T(2,128)}', space=vmem, size = 0x800, scoped, tag = 'scratch operand']
  #allocation4 [shape = 'f32[2,255]{1,0:T(2,128)}', space=vmem, size = 0x800, scoped, tag = 'scratch operand']
  #allocation5 [shape = 'f32[2,255]{1,0:T(2,128)}', space=vmem, size = 0x800, scoped, tag = 'scratch operand']
  %s0 = inlined_call_operand.vmem [shape: f32[2,8,255], index: 0, kind: input, shape index: {}]
  %s1 = inlined_call_operand.vmem [shape: f32[2,8,255], index: 1, kind: input, shape index: {}]
  %s2 = inlined_call_operand.hbm [shape: f32[255,256], index: 2, kind: input, shape index: {}]
  %s3 = inlined_call_operand.hbm [shape: f32[255,256], index: 3, kind: input, shape index: {}]
  %s4 = inlined_call_operand.vmem [shape: f32[2,256], index: 4, kind: input, shape index: {}]
  %s5 = inlined_call_operand.vmem [shape: f32[1,256], index: 5, kind: input, shape index: {}]
  %s6 = inlined_call_operand.vmem [shape: f32[256,4], index: 6, kind: input, shape index: {}]
  %s7 = inlined_call_operand.vmem [shape: f32[1,4], index: 7, kind: input, shape index: {}]
  %s8 = inlined_call_operand.vmem [shape: f32[1,4], index: 8, kind: input, shape index: {}]
  %s9 = inlined_call_operand.hbm [shape: f32[1,1], index: 9, kind: output, shape index: {}]
  %s10 = sld [smem:[#allocation0]]
  $region62: #{tpu_custom_call.1} parent=0
    _
  %s12 = ssub.s32 1, %s10
  %s13 = scalar_select 0, %s12, %s10
  $region1: #{tpu_custom_call.1} parent=0
    #allocation6 [shape = 'u8[262144]{0}', space=vmem, size = 0x40000, scoped, tag = 'input window, operand 2, single buffered']
    #allocation7 [shape = 's32[1]{0}', space=sflag, size = 0x4, scoped, tag = 'scoped memory for tpu_custom_call.1']
    #allocation8 [shape = 's32[1]{0}', space=sflag, size = 0x4, scoped, tag = 'scoped memory for tpu_custom_call.1']
    #allocation9 [shape = 'u8[262144]{0}', space=vmem, size = 0x40000, scoped, tag = 'input window, operand 3, single buffered']
    #allocation10 [shape = 's32[1]{0}', space=sflag, size = 0x4, scoped, tag = 'scoped memory for tpu_custom_call.1']
    #allocation11 [shape = 'u8[512]{0}', space=vmem, size = 0x400, scoped, tag = 'output window, operand 0, single buffered']
    %14 = vsyncpa [#allocation7], 0
    %15 = vsyncpa [#allocation10], 0
    %16 = vsyncpa [#allocation8], 0
    // Predicated region
    $region2: #{tpu_custom_call.1} parent=1 // pred_check
      _
    $region3: #{tpu_custom_call.1} parent=1 // pred_check_branch
      %18 = sbr.rel (0) target = $region5
    $region4: #{tpu_custom_call.1} parent=1 // pred_region
      _
    $region5: #{tpu_custom_call.1} parent=1 // pred_fallthru
      _
    // Predicated region
    $region6: #{tpu_custom_call.1} parent=1 // pred_check
      _
    $region7: #{tpu_custom_call.1} parent=1 // pred_check_branch
      %20 = sbr.rel (0) target = $region9
    $region8: #{tpu_custom_call.1} parent=1 // pred_region
      _
    $region9: #{tpu_custom_call.1} parent=1 // pred_fallthru
      _
    // Predicated region
    $region10: #{tpu_custom_call.1} parent=1 // pred_check
      _
    $region11: #{tpu_custom_call.1} parent=1 // pred_check_branch
      %22 = sbr.rel (0) target = $region13
    $region12: #{tpu_custom_call.1} parent=1 // pred_region
      %s24 = ssub.s32 8192, 8192
      %25 = vsyncadd [#allocation7], %s24
      %s26 = sshll.u32 [#allocation6], 4
      %s27 = int_to_ptr.vmem [resolvable:$true] %s26
      %32 = dma.hbm_to_vmem [thread:$0]  %s2, 8192, %s27, [#allocation7], 256, 256, 16
    $region13: #{tpu_custom_call.1} parent=1 // pred_fallthru
      _
    // Predicated region
    $region14: #{tpu_custom_call.1} parent=1 // pred_check
      _
    $region15: #{tpu_custom_call.1} parent=1 // pred_check_branch
      %34 = sbr.rel (0) target = $region17
    $region16: #{tpu_custom_call.1} parent=1 // pred_region
      %s36 = ssub.s32 8192, 8192
      %37 = vsyncadd [#allocation10], %s36
      %s38 = sshll.u32 [#allocation9], 4
      %s39 = int_to_ptr.vmem [resolvable:$true] %s38
      %44 = dma.hbm_to_vmem [thread:$0]  %s3, 8192, %s39, [#allocation10], 256, 256, 16
    $region17: #{tpu_custom_call.1} parent=1 // pred_fallthru
      _
    // Predicated region
    $region18: #{tpu_custom_call.1} parent=1 // pred_check
      _
    $region19: #{tpu_custom_call.1} parent=1 // pred_check_branch
      %46 = sbr.rel (0) target = $region21
    $region20: #{tpu_custom_call.1} parent=1 // pred_region
      _
    $region21: #{tpu_custom_call.1} parent=1 // pred_fallthru
      _
    // Predicated region
    $region22: #{tpu_custom_call.1} parent=1 // pred_check
      _
    $region23: #{tpu_custom_call.1} parent=1 // pred_check_branch
      %48 = sbr.rel (0) target = $region25
    $region24: #{tpu_custom_call.1} parent=1 // pred_region
      _
    $region25: #{tpu_custom_call.1} parent=1 // pred_fallthru
      _
    // Predicated region
    $region26: #{tpu_custom_call.1} parent=1 // pred_check
      _
    $region27: #{tpu_custom_call.1} parent=1 // pred_check_branch
      %50 = sbr.rel (0) target = $region29
    $region28: #{tpu_custom_call.1} parent=1 // pred_region
      _
    $region29: #{tpu_custom_call.1} parent=1 // pred_fallthru
      _
    // Predicated region
    $region30: #{tpu_custom_call.1} parent=1 // pred_check
      _
    $region31: #{tpu_custom_call.1} parent=1 // pred_check_branch
      %52 = sbr.rel (0) target = $region33
    $region32: #{tpu_custom_call.1} parent=1 // pred_region
      _
    $region33: #{tpu_custom_call.1} parent=1 // pred_fallthru
      _
    // Predicated region
    $region34: #{tpu_custom_call.1} parent=1 // pred_check
      _
    $region35: #{tpu_custom_call.1} parent=1 // pred_check_branch
      %54 = sbr.rel (0) target = $region37
    $region36: #{tpu_custom_call.1} parent=1 // pred_region
      _
    $region37: #{tpu_custom_call.1} parent=1 // pred_fallthru
      _
    // Predicated region
    $region38: #{tpu_custom_call.1} parent=1 // pred_check
      _
    $region39: #{tpu_custom_call.1} parent=1 // pred_check_branch
      %56 = sbr.rel (0) target = $region41
    $region40: #{tpu_custom_call.1} parent=1 // pred_region
      %57 = dma.done [#allocation7], 8192
    $region41: #{tpu_custom_call.1} parent=1 // pred_fallthru
      _
    // Predicated region
    $region42: #{tpu_custom_call.1} parent=1 // pred_check
      _
    $region43: #{tpu_custom_call.1} parent=1 // pred_check_branch
      %59 = sbr.rel (0) target = $region45
    $region44: #{tpu_custom_call.1} parent=1 // pred_region
      %60 = dma.done [#allocation10], 8192
    $region45: #{tpu_custom_call.1} parent=1 // pred_fallthru
      _
    %p61 = scmp.eq.s32.totalorder 0, 0
    // Predicated region
    $region46: #{tpu_custom_call.1} parent=1 // pred_check
      %p62 = pneg %p61
    $region47: #{tpu_custom_call.1} parent=1 // pred_check_branch
      %64 = sbr.rel (%p62) target = $region49
    $region48: #{tpu_custom_call.1} parent=1 // pred_region
      %vm65 = vcmask 1041408
      %vm66 = vcmask 1035266
      %vm67 = vmor %vm66, %vm65
      %68 = vst.msk [vmem:[#allocation2] sm:$0xf] %vm67, 0.0
      %69 = vst.msk [vmem:[#allocation3] sm:$0xf] %vm67, 0.0
      %70 = vst.msk [vmem:[#allocation4] sm:$0xf] %vm67, 0.0
      %71 = vst.msk [vmem:[#allocation5] sm:$0xf] %vm67, 0.0
    $region49: #{tpu_custom_call.1} parent=1 // pred_fallthru
      _
    %v72 = vld [vmem:[%s0] sm:$0xff]
    %v73 = vld [vmem:[%s0 + $0x8] sm:$0xff]
    %v74 = vld [vmem:[%s0 + $0x10] sm:$0xff]
    %v75 = vld [vmem:[%s0 + $0x18] sm:$0xff]
    %v76 = vld [vmem:[%s1] sm:$0xff]
    %v77 = vld [vmem:[%s1 + $0x8] sm:$0xff]
    %v78 = vld [vmem:[%s1 + $0x10] sm:$0xff]
    %v79 = vld [vmem:[%s1 + $0x18] sm:$0xff]
    %v80 = vld [vmem:[#allocation2] sm:$0xf]
    %v81 = vrot.slane %v72, 4
    %v82 = vadd.f32 %v72, %v81
    %v83 = vrot.slane %v82, 2
    %v84 = vadd.f32 %v82, %v83
    %v85 = vrot.slane %v84, 1
    %v86 = vadd.f32 %v84, %v85
    %vm87 = vcmask 1039360
    %v88 = vsel %vm87, %v73, 0.0
    %v89 = vrot.slane %v88, 4
    %v90 = vadd.f32 %v88, %v89
    %v91 = vrot.slane %v90, 2
    %v92 = vadd.f32 %v90, %v91
    %v93 = vrot.slane %v92, 1
    %v94 = vadd.f32 %v92, %v93
    %v95 = vrot.slane %v74, 4
    %v96 = vadd.f32 %v74, %v95
    %v97 = vrot.slane %v96, 2
    %v98 = vadd.f32 %v96, %v97
    %v99 = vrot.slane %v98, 1
    %v100 = vadd.f32 %v98, %v99
    %v101 = vsel %vm87, %v75, 0.0
    %v102 = vrot.slane %v101, 4
    %v103 = vadd.f32 %v101, %v102
    %v104 = vrot.slane %v103, 2
    %v105 = vadd.f32 %v103, %v104
    %v106 = vrot.slane %v105, 1
    %v107 = vadd.f32 %v105, %v106
    %v112 = vcombine.low %v86, %v94
    %v114 = vunpack.c.l.s4 1983009808
    %v115 = vunpack.c.0.s8 %v114
    %v116 = vlaneseq
    %v117 = vshrl.u32 %v116, 7
    %v118 = vsub.s32 %v115, %v117
    %v119 = vrot.slane %v112, %v118
    %v120 = vcombine.low %v100, %v107
    %v122 = vunpack.c.l.s4 1983009808
    %v123 = vunpack.c.0.s8 %v122
    %v124 = vlaneseq
    %v125 = vshrl.u32 %v124, 7
    %v126 = vsub.s32 %v123, %v125
    %v127 = vrot.slane %v120, %v126
    %vm128 = vcmask 1044484
    %v129 = vsel %vm128, %v119, %v119
    %vm130 = vcmask 1046534
    %v131 = vsel %vm130, %v119, %v129
    %v132 = vrot.slane %v127, 7
    %vm133 = vcmask 1041409
    %v134 = vsel %vm133, %v132, %v131
    %vm135 = vcmask 1043459
    %v136 = vsel %vm135, %v132, %v134
    %vm137 = vcmask 1045509
    %v138 = vsel %vm137, %v132, %v136
    %vm139 = vcmask 1047559
    %v140 = vsel %vm139, %v132, %v138
    %v142 = vadd.f32 %v80, %v140
    %vm143 = vcmask 1041408
    %vm144 = vcmask 1035266
    %vm145 = vmor %vm144, %vm143
    %146 = vst.msk [vmem:[#allocation2] sm:$0xf] %vm145, %v142
    %v147 = vld [vmem:[#allocation3] sm:$0xf]
    %v148 = vmul.f32 %v72, %v72
    %v149 = vmul.f32 %v73, %v73
    %v150 = vmul.f32 %v74, %v74
    %v151 = vmul.f32 %v75, %v75
    %v152 = vrot.slane %v148, 4
    %v153 = vadd.f32 %v148, %v152
    %v154 = vrot.slane %v153, 2
    %v155 = vadd.f32 %v153, %v154
    %v156 = vrot.slane %v155, 1
    %v157 = vadd.f32 %v155, %v156
    %v158 = vsel %vm87, %v149, 0.0
    %v159 = vrot.slane %v158, 4
    %v160 = vadd.f32 %v158, %v159
    %v161 = vrot.slane %v160, 2
    %v162 = vadd.f32 %v160, %v161
    %v163 = vrot.slane %v162, 1
    %v164 = vadd.f32 %v162, %v163
    %v165 = vrot.slane %v150, 4
    %v166 = vadd.f32 %v150, %v165
    %v167 = vrot.slane %v166, 2
    %v168 = vadd.f32 %v166, %v167
    %v169 = vrot.slane %v168, 1
    %v170 = vadd.f32 %v168, %v169
    %v171 = vsel %vm87, %v151, 0.0
    %v172 = vrot.slane %v171, 4
    %v173 = vadd.f32 %v171, %v172
    %v174 = vrot.slane %v173, 2
    %v175 = vadd.f32 %v173, %v174
    %v176 = vrot.slane %v175, 1
    %v177 = vadd.f32 %v175, %v176
    %v182 = vcombine.low %v157, %v164
    %v184 = vunpack.c.l.s4 1983009808
    %v185 = vunpack.c.0.s8 %v184
    %v186 = vlaneseq
    %v187 = vshrl.u32 %v186, 7
    %v188 = vsub.s32 %v185, %v187
    %v189 = vrot.slane %v182, %v188
    %v190 = vcombine.low %v170, %v177
    %v192 = vunpack.c.l.s4 1983009808
    %v193 = vunpack.c.0.s8 %v192
    %v194 = vlaneseq
    %v195 = vshrl.u32 %v194, 7
    %v196 = vsub.s32 %v193, %v195
    %v197 = vrot.slane %v190, %v196
    %v198 = vsel %vm128, %v189, %v189
    %v199 = vsel %vm130, %v189, %v198
    %v200 = vrot.slane %v197, 7
    %v201 = vsel %vm133, %v200, %v199
    %v202 = vsel %vm135, %v200, %v201
    %v203 = vsel %vm137, %v200, %v202
    %v204 = vsel %vm139, %v200, %v203
    %v206 = vadd.f32 %v147, %v204
    %207 = vst.msk [vmem:[#allocation3] sm:$0xf] %vm145, %v206
    %v208 = vld [vmem:[#allocation4] sm:$0xf]
    %v209 = vrot.slane %v76, 4
    %v210 = vadd.f32 %v76, %v209
    %v211 = vrot.slane %v210, 2
    %v212 = vadd.f32 %v210, %v211
    %v213 = vrot.slane %v212, 1
    %v214 = vadd.f32 %v212, %v213
    %v215 = vsel %vm87, %v77, 0.0
    %v216 = vrot.slane %v215, 4
    %v217 = vadd.f32 %v215, %v216
    %v218 = vrot.slane %v217, 2
    %v219 = vadd.f32 %v217, %v218
    %v220 = vrot.slane %v219, 1
    %v221 = vadd.f32 %v219, %v220
    %v222 = vrot.slane %v78, 4
    %v223 = vadd.f32 %v78, %v222
    %v224 = vrot.slane %v223, 2
    %v225 = vadd.f32 %v223, %v224
    %v226 = vrot.slane %v225, 1
    %v227 = vadd.f32 %v225, %v226
    %v228 = vsel %vm87, %v79, 0.0
    %v229 = vrot.slane %v228, 4
    %v230 = vadd.f32 %v228, %v229
    %v231 = vrot.slane %v230, 2
    %v232 = vadd.f32 %v230, %v231
    %v233 = vrot.slane %v232, 1
    %v234 = vadd.f32 %v232, %v233
    %v239 = vcombine.low %v214, %v221
    %v241 = vunpack.c.l.s4 1983009808
    %v242 = vunpack.c.0.s8 %v241
    %v243 = vlaneseq
    %v244 = vshrl.u32 %v243, 7
    %v245 = vsub.s32 %v242, %v244
    %v246 = vrot.slane %v239, %v245
    %v247 = vcombine.low %v227, %v234
    %v249 = vunpack.c.l.s4 1983009808
    %v250 = vunpack.c.0.s8 %v249
    %v251 = vlaneseq
    %v252 = vshrl.u32 %v251, 7
    %v253 = vsub.s32 %v250, %v252
    %v254 = vrot.slane %v247, %v253
    %v255 = vsel %vm128, %v246, %v246
    %v256 = vsel %vm130, %v246, %v255
    %v257 = vrot.slane %v254, 7
    %v258 = vsel %vm133, %v257, %v256
    %v259 = vsel %vm135, %v257, %v258
    %v260 = vsel %vm137, %v257, %v259
    %v261 = vsel %vm139, %v257, %v260
    %v263 = vadd.f32 %v208, %v261
    %264 = vst.msk [vmem:[#allocation4] sm:$0xf] %vm145, %v263
    %v265 = vld [vmem:[#allocation5] sm:$0xf]
    %v266 = vmul.f32 %v76, %v76
    %v267 = vmul.f32 %v77, %v77
    %v268 = vmul.f32 %v78, %v78
    %v269 = vmul.f32 %v79, %v79
    %v270 = vrot.slane %v266, 4
    %v271 = vadd.f32 %v266, %v270
    %v272 = vrot.slane %v271, 2
    %v273 = vadd.f32 %v271, %v272
    %v274 = vrot.slane %v273, 1
    %v275 = vadd.f32 %v273, %v274
    %v276 = vsel %vm87, %v267, 0.0
    %v277 = vrot.slane %v276, 4
    %v278 = vadd.f32 %v276, %v277
    %v279 = vrot.slane %v278, 2
    %v280 = vadd.f32 %v278, %v279
    %v281 = vrot.slane %v280, 1
    %v282 = vadd.f32 %v280, %v281
    %v283 = vrot.slane %v268, 4
    %v284 = vadd.f32 %v268, %v283
    %v285 = vrot.slane %v284, 2
    %v286 = vadd.f32 %v284, %v285
    %v287 = vrot.slane %v286, 1
    %v288 = vadd.f32 %v286, %v287
    %v289 = vsel %vm87, %v269, 0.0
    %v290 = vrot.slane %v289, 4
    %v291 = vadd.f32 %v289, %v290
    %v292 = vrot.slane %v291, 2
    %v293 = vadd.f32 %v291, %v292
    %v294 = vrot.slane %v293, 1
    %v295 = vadd.f32 %v293, %v294
    %v300 = vcombine.low %v275, %v282
    %v302 = vunpack.c.l.s4 1983009808
    %v303 = vunpack.c.0.s8 %v302
    %v304 = vlaneseq
    %v305 = vshrl.u32 %v304, 7
    %v306 = vsub.s32 %v303, %v305
    %v307 = vrot.slane %v300, %v306
    %v308 = vcombine.low %v288, %v295
    %v310 = vunpack.c.l.s4 1983009808
    %v311 = vunpack.c.0.s8 %v310
    %v312 = vlaneseq
    %v313 = vshrl.u32 %v312, 7
    %v314 = vsub.s32 %v311, %v313
    %v315 = vrot.slane %v308, %v314
    %v316 = vsel %vm128, %v307, %v307
    %v317 = vsel %vm130, %v307, %v316
    %v318 = vrot.slane %v315, 7
    %v319 = vsel %vm133, %v318, %v317
    %v320 = vsel %vm135, %v318, %v319
    %v321 = vsel %vm137, %v318, %v320
    %v322 = vsel %vm139, %v318, %v321
    %v324 = vadd.f32 %v265, %v322
    %325 = vst.msk [vmem:[#allocation5] sm:$0xf] %vm145, %v324
    // Predicated region
    $region50: #{tpu_custom_call.1} parent=1 // pred_check
      %p326 = pneg %p61
    $region51: #{tpu_custom_call.1} parent=1 // pred_check_branch
      %328 = sbr.rel (%p326) target = $region53
    $region52: #{tpu_custom_call.1} parent=1 // pred_region
      %v329 = vld [vmem:[#allocation2] sm:$0xf]
      %v330 = vrcp.pop 8.0
      %v331 = vmul.f32 %v329, %v330
      %v332 = vld [vmem:[#allocation4] sm:$0xf]
      %v333 = vmul.f32 %v332, %v330
      %v334 = vld [vmem:[#allocation3] sm:$0xf]
      %v335 = vmul.f32 %v331, 8.0
      %v336 = vmul.f32 %v335, %v331
      %v337 = vsub.f32 %v334, %v336
      %v338 = vrcp.pop 7.0
      %v339 = vmul.f32 %v337, %v338
      %v340 = vld [vmem:[#allocation5] sm:$0xf]
      %v341 = vmul.f32 %v333, 8.0
      %v342 = vmul.f32 %v341, %v333
      %v343 = vsub.f32 %v340, %v342
      %v344 = vmul.f32 %v343, %v338
      %v347 = vunpack.c.l.s4 1983009808
      %v348 = vunpack.c.0.s8 %v347
      %v349 = vlaneseq
      %v350 = vshrl.u32 %v349, 7
      %v351 = vsub.s32 %v348, %v350
      %v352 = vrot.slane %v339, %v351
      %v353 = vcombine.high %v352, %v352
      %v356 = vsel %vm143, %v352, 0.0
      %vm357 = vcmask 1033216
      %v358 = vsel %vm357, %v353, 0.0
      %v359 = vadd.f32 %v356, %v358
      %360 = vadd.xlane.f32.xlu0 %v359
      %v361 = vpop.xlane.xlu0 %360
      %v362 = vrcp.pop 255.0
      %v363 = vmul.f32 %v361, %v362
      %v366 = vunpack.c.l.s4 1983009808
      %v367 = vunpack.c.0.s8 %v366
      %v368 = vlaneseq
      %v369 = vshrl.u32 %v368, 7
      %v370 = vsub.s32 %v367, %v369
      %v371 = vrot.slane %v344, %v370
      %v372 = vcombine.high %v371, %v371
      %v375 = vsel %vm143, %v371, 0.0
      %v376 = vsel %vm357, %v372, 0.0
      %v377 = vadd.f32 %v375, %v376
      %378 = vadd.xlane.f32.xlu0 %v377
      %v379 = vpop.xlane.xlu0 %378
      %v380 = vmul.f32 %v379, %v362
      %v381 = vld [vmem:[%s4] sm:$0xf]
      %v382 = vld [vmem:[#allocation6] sm:$0xff]
      %v383 = vld [vmem:[#allocation6 + $0x8] sm:$0xff]
      %v384 = vld [vmem:[#allocation6 + $0x10] sm:$0xff]
      %v385 = vld [vmem:[#allocation6 + $0x18] sm:$0xff]
      %v386 = vld [vmem:[#allocation6 + $0x20] sm:$0xff]
      %v387 = vld [vmem:[#allocation6 + $0x28] sm:$0xff]
      %v388 = vld [vmem:[#allocation6 + $0x30] sm:$0xff]
      %v389 = vld [vmem:[#allocation6 + $0x38] sm:$0xff]
      %v390 = vld [vmem:[#allocation6 + $0x40] sm:$0xff]
      %v391 = vld [vmem:[#allocation6 + $0x48] sm:$0xff]
      %v392 = vld [vmem:[#allocation6 + $0x50] sm:$0xff]
      %v393 = vld [vmem:[#allocation6 + $0x58] sm:$0xff]
      %v394 = vld [vmem:[#allocation6 + $0x60] sm:$0xff]
      %v395 = vld [vmem:[#allocation6 + $0x68] sm:$0xff]
      %v396 = vld [vmem:[#allocation6 + $0x70] sm:$0xff]
      %v397 = vld [vmem:[#allocation6 + $0x78] sm:$0xff]
      %v398 = vld [vmem:[#allocation6 + $0x80] sm:$0xff]
      %v399 = vld [vmem:[#allocation6 + $0x88] sm:$0xff]
      %v400 = vld [vmem:[#allocation6 + $0x90] sm:$0xff]
      %v401 = vld [vmem:[#allocation6 + $0x98] sm:$0xff]
      %v402 = vld [vmem:[#allocation6 + $0xa0] sm:$0xff]
      %v403 = vld [vmem:[#allocation6 + $0xa8] sm:$0xff]
      %v404 = vld [vmem:[#allocation6 + $0xb0] sm:$0xff]
      %v405 = vld [vmem:[#allocation6 + $0xb8] sm:$0xff]
      %v406 = vld [vmem:[#allocation6 + $0xc0] sm:$0xff]
      %v407 = vld [vmem:[#allocation6 + $0xc8] sm:$0xff]
      %v408 = vld [vmem:[#allocation6 + $0xd0] sm:$0xff]
      %v409 = vld [vmem:[#allocation6 + $0xd8] sm:$0xff]
      %v410 = vld [vmem:[#allocation6 + $0xe0] sm:$0xff]
      %v411 = vld [vmem:[#allocation6 + $0xe8] sm:$0xff]
      %v412 = vld [vmem:[#allocation6 + $0xf0] sm:$0xff]
      %v413 = vld [vmem:[#allocation6 + $0xf8] sm:$0xff]
      %v414 = vld [vmem:[#allocation6 + $0x100] sm:$0xff]
      %v415 = vld [vmem:[#allocation6 + $0x108] sm:$0xff]
      %v416 = vld [vmem:[#allocation6 + $0x110] sm:$0xff]
      %v417 = vld [vmem:[#allocation6 + $0x118] sm:$0xff]
      %v418 = vld [vmem:[#allocation6 + $0x120] sm:$0xff]
      %v419 = vld [vmem:[#allocation6 + $0x128] sm:$0xff]
      %v420 = vld [vmem:[#allocation6 + $0x130] sm:$0xff]
      %v421 = vld [vmem:[#allocation6 + $0x138] sm:$0xff]
      %v422 = vld [vmem:[#allocation6 + $0x140] sm:$0xff]
      %v423 = vld [vmem:[#allocation6 + $0x148] sm:$0xff]
      %v424 = vld [vmem:[#allocation6 + $0x150] sm:$0xff]
      %v425 = vld [vmem:[#allocation6 + $0x158] sm:$0xff]
      %v426 = vld [vmem:[#allocation6 + $0x160] sm:$0xff]
      %v427 = vld [vmem:[#allocation6 + $0x168] sm:$0xff]
      %v428 = vld [vmem:[#allocation6 + $0x170] sm:$0xff]
      %v429 = vld [vmem:[#allocation6 + $0x178] sm:$0xff]
      %v430 = vld [vmem:[#allocation6 + $0x180] sm:$0xff]
      %v431 = vld [vmem:[#allocation6 + $0x188] sm:$0xff]
      %v432 = vld [vmem:[#allocation6 + $0x190] sm:$0xff]
      %v433 = vld [vmem:[#allocation6 + $0x198] sm:$0xff]
      %v434 = vld [vmem:[#allocation6 + $0x1a0] sm:$0xff]
      %v435 = vld [vmem:[#allocation6 + $0x1a8] sm:$0xff]
      %v436 = vld [vmem:[#allocation6 + $0x1b0] sm:$0xff]
      %v437 = vld [vmem:[#allocation6 + $0x1b8] sm:$0xff]
      %v438 = vld [vmem:[#allocation6 + $0x1c0] sm:$0xff]
      %v439 = vld [vmem:[#allocation6 + $0x1c8] sm:$0xff]
      %v440 = vld [vmem:[#allocation6 + $0x1d0] sm:$0xff]
      %v441 = vld [vmem:[#allocation6 + $0x1d8] sm:$0xff]
      %v442 = vld [vmem:[#allocation6 + $0x1e0] sm:$0xff]
      %v443 = vld [vmem:[#allocation6 + $0x1e8] sm:$0xff]
      %v444 = vld [vmem:[#allocation6 + $0x1f0] sm:$0x7f]
      %v445 = vld [vmem:[#allocation6 + $0x1f8] sm:$0x7f]
      %v446 = vld [vmem:[#allocation9] sm:$0xff]
      %v447 = vld [vmem:[#allocation9 + $0x8] sm:$0xff]
      %v448 = vld [vmem:[#allocation9 + $0x10] sm:$0xff]
      %v449 = vld [vmem:[#allocation9 + $0x18] sm:$0xff]
      %v450 = vld [vmem:[#allocation9 + $0x20] sm:$0xff]
      %v451 = vld [vmem:[#allocation9 + $0x28] sm:$0xff]
      %v452 = vld [vmem:[#allocation9 + $0x30] sm:$0xff]
      %v453 = vld [vmem:[#allocation9 + $0x38] sm:$0xff]
      %v454 = vld [vmem:[#allocation9 + $0x40] sm:$0xff]
      %v455 = vld [vmem:[#allocation9 + $0x48] sm:$0xff]
      %v456 = vld [vmem:[#allocation9 + $0x50] sm:$0xff]
      %v457 = vld [vmem:[#allocation9 + $0x58] sm:$0xff]
      %v458 = vld [vmem:[#allocation9 + $0x60] sm:$0xff]
      %v459 = vld [vmem:[#allocation9 + $0x68] sm:$0xff]
      %v460 = vld [vmem:[#allocation9 + $0x70] sm:$0xff]
      %v461 = vld [vmem:[#allocation9 + $0x78] sm:$0xff]
      %v462 = vld [vmem:[#allocation9 + $0x80] sm:$0xff]
      %v463 = vld [vmem:[#allocation9 + $0x88] sm:$0xff]
      %v464 = vld [vmem:[#allocation9 + $0x90] sm:$0xff]
      %v465 = vld [vmem:[#allocation9 + $0x98] sm:$0xff]
      %v466 = vld [vmem:[#allocation9 + $0xa0] sm:$0xff]
      %v467 = vld [vmem:[#allocation9 + $0xa8] sm:$0xff]
      %v468 = vld [vmem:[#allocation9 + $0xb0] sm:$0xff]
      %v469 = vld [vmem:[#allocation9 + $0xb8] sm:$0xff]
      %v470 = vld [vmem:[#allocation9 + $0xc0] sm:$0xff]
      %v471 = vld [vmem:[#allocation9 + $0xc8] sm:$0xff]
      %v472 = vld [vmem:[#allocation9 + $0xd0] sm:$0xff]
      %v473 = vld [vmem:[#allocation9 + $0xd8] sm:$0xff]
      %v474 = vld [vmem:[#allocation9 + $0xe0] sm:$0xff]
      %v475 = vld [vmem:[#allocation9 + $0xe8] sm:$0xff]
      %v476 = vld [vmem:[#allocation9 + $0xf0] sm:$0xff]
      %v477 = vld [vmem:[#allocation9 + $0xf8] sm:$0xff]
      %v478 = vld [vmem:[#allocation9 + $0x100] sm:$0xff]
      %v479 = vld [vmem:[#allocation9 + $0x108] sm:$0xff]
      %v480 = vld [vmem:[#allocation9 + $0x110] sm:$0xff]
      %v481 = vld [vmem:[#allocation9 + $0x118] sm:$0xff]
      %v482 = vld [vmem:[#allocation9 + $0x120] sm:$0xff]
      %v483 = vld [vmem:[#allocation9 + $0x128] sm:$0xff]
      %v484 = vld [vmem:[#allocation9 + $0x130] sm:$0xff]
      %v485 = vld [vmem:[#allocation9 + $0x138] sm:$0xff]
      %v486 = vld [vmem:[#allocation9 + $0x140] sm:$0xff]
      %v487 = vld [vmem:[#allocation9 + $0x148] sm:$0xff]
      %v488 = vld [vmem:[#allocation9 + $0x150] sm:$0xff]
      %v489 = vld [vmem:[#allocation9 + $0x158] sm:$0xff]
      %v490 = vld [vmem:[#allocation9 + $0x160] sm:$0xff]
      %v491 = vld [vmem:[#allocation9 + $0x168] sm:$0xff]
      %v492 = vld [vmem:[#allocation9 + $0x170] sm:$0xff]
      %v493 = vld [vmem:[#allocation9 + $0x178] sm:$0xff]
      %v494 = vld [vmem:[#allocation9 + $0x180] sm:$0xff]
      %v495 = vld [vmem:[#allocation9 + $0x188] sm:$0xff]
      %v496 = vld [vmem:[#allocation9 + $0x190] sm:$0xff]
      %v497 = vld [vmem:[#allocation9 + $0x198] sm:$0xff]
      %v498 = vld [vmem:[#allocation9 + $0x1a0] sm:$0xff]
      %v499 = vld [vmem:[#allocation9 + $0x1a8] sm:$0xff]
      %v500 = vld [vmem:[#allocation9 + $0x1b0] sm:$0xff]
      %v501 = vld [vmem:[#allocation9 + $0x1b8] sm:$0xff]
      %v502 = vld [vmem:[#allocation9 + $0x1c0] sm:$0xff]
      %v503 = vld [vmem:[#allocation9 + $0x1c8] sm:$0xff]
      %v504 = vld [vmem:[#allocation9 + $0x1d0] sm:$0xff]
      %v505 = vld [vmem:[#allocation9 + $0x1d8] sm:$0xff]
      %v506 = vld [vmem:[#allocation9 + $0x1e0] sm:$0xff]
      %v507 = vld [vmem:[#allocation9 + $0x1e8] sm:$0xff]
      %v508 = vld [vmem:[#allocation9 + $0x1f0] sm:$0x7f]
      %v509 = vld [vmem:[#allocation9 + $0x1f8] sm:$0x7f]
      %v512 = vunpack.c.l.s4 1983009808
      %v513 = vunpack.c.0.s8 %v512
      %v514 = vlaneseq
      %v515 = vshrl.u32 %v514, 7
      %v516 = vsub.s32 %v513, %v515
      %v517 = vrot.slane %v333, %v516
      %v518 = vcombine.high %v517, %v517
      %v520 = vsel %vm87, %v518, 0
      %vm522 = vcmask 1046528
      %v524 = vsel %vm522, %v508, 0
      %v527 = vsel %vm522, %v509, 0
      %529 = vmatprep.subr.mxu0 %v477
      %530 = vmatpush1.msra.mxu0 %v476
      %531 = vmatprep.subr.mxu0 %v475
      %532 = vmatpush1.msra.mxu0 %v474
      %533 = vmatprep.subr.mxu0 %v473
      %534 = vmatpush1.msra.mxu0 %v472
      %535 = vmatprep.subr.mxu0 %v471
      %536 = vmatpush1.msra.mxu0 %v470
      %537 = vmatprep.subr.mxu0 %v469
      %538 = vmatpush1.msra.mxu0 %v468
      %539 = vmatprep.subr.mxu0 %v467
      %540 = vmatpush1.msra.mxu0 %v466
      %541 = vmatprep.subr.mxu0 %v465
      %542 = vmatpush1.msra.mxu0 %v464
      %543 = vmatprep.subr.mxu0 %v463
      %544 = vmatpush1.msra.mxu0 %v462
      %545 = vmatprep.subr.mxu0 %v461
      %546 = vmatpush1.msra.mxu0 %v460
      %547 = vmatprep.subr.mxu0 %v459
      %548 = vmatpush1.msra.mxu0 %v458
      %549 = vmatprep.subr.mxu0 %v457
      %550 = vmatpush1.msra.mxu0 %v456
      %551 = vmatprep.subr.mxu0 %v455
      %552 = vmatpush1.msra.mxu0 %v454
      %553 = vmatprep.subr.mxu0 %v453
      %554 = vmatpush1.msra.mxu0 %v452
      %555 = vmatprep.subr.mxu0 %v451
      %556 = vmatpush1.msra.mxu0 %v450
      %557 = vmatprep.subr.mxu0 %v449
      %558 = vmatpush1.msra.mxu0 %v448
      %559 = vmatprep.subr.mxu0 %v447
      %560 = vmatpush1.msra.mxu0 %v446
      %561 = vmatprep.subr.mxu0 %v527
      %562 = vmatpush2.msra.mxu0 %v524
      %563 = vmatprep.subr.mxu0 %v507
      %564 = vmatpush2.msra.mxu0 %v506
      %565 = vmatprep.subr.mxu0 %v505
      %566 = vmatpush2.msra.mxu0 %v504
      %567 = vmatprep.subr.mxu0 %v503
      %568 = vmatpush2.msra.mxu0 %v502
      %569 = vmatprep.subr.mxu0 %v501
      %570 = vmatpush2.msra.mxu0 %v500
      %571 = vmatprep.subr.mxu0 %v499
      %572 = vmatpush2.msra.mxu0 %v498
      %573 = vmatprep.subr.mxu0 %v497
      %574 = vmatpush2.msra.mxu0 %v496
      %575 = vmatprep.subr.mxu0 %v495
      %576 = vmatpush2.msra.mxu0 %v494
      %577 = vmatprep.subr.mxu0 %v493
      %578 = vmatpush2.msra.mxu0 %v492
      %579 = vmatprep.subr.mxu0 %v491
      %580 = vmatpush2.msra.mxu0 %v490
      %581 = vmatprep.subr.mxu0 %v489
      %582 = vmatpush2.msra.mxu0 %v488
      %583 = vmatprep.subr.mxu0 %v487
      %584 = vmatpush2.msra.mxu0 %v486
      %585 = vmatprep.subr.mxu0 %v485
      %586 = vmatpush2.msra.mxu0 %v484
      %587 = vmatprep.subr.mxu0 %v483
      %588 = vmatpush2.msra.mxu0 %v482
      %589 = vmatprep.subr.mxu0 %v481
      %590 = vmatpush2.msra.mxu0 %v480
      %591 = vmatprep.subr.mxu0 %v479
      %592 = vmatpush2.msra.mxu0 %v478
      %593 = vmatprep.mubr.f32.mxu0 %v520
      %594 = vmatmul.mubr.f32.gmra.mxu0 %v517
      %v595 = vpop.f32.mrf.mxu0
      %v596 = vadd.f32 0.0, %v595
      %v597 = vpop.f32.mrf.mxu0
      %v598 = vadd.f32 0.0, %v597
      %599 = vdwg.mxu0
      %v602 = vunpack.c.l.s4 1983009808
      %v603 = vunpack.c.0.s8 %v602
      %v604 = vlaneseq
      %v605 = vshrl.u32 %v604, 7
      %v606 = vsub.s32 %v603, %v605
      %v607 = vrot.slane %v331, %v606
      %v608 = vcombine.high %v607, %v607
      %v610 = vsel %vm87, %v608, 0
      %v613 = vsel %vm522, %v444, 0
      %v616 = vsel %vm522, %v445, 0
      %618 = vmatprep.subr.mxu0 %v413
      %619 = vmatpush1.msra.mxu0 %v412
      %620 = vmatprep.subr.mxu0 %v411
      %621 = vmatpush1.msra.mxu0 %v410
      %622 = vmatprep.subr.mxu0 %v409
      %623 = vmatpush1.msra.mxu0 %v408
      %624 = vmatprep.subr.mxu0 %v407
      %625 = vmatpush1.msra.mxu0 %v406
      %626 = vmatprep.subr.mxu0 %v405
      %627 = vmatpush1.msra.mxu0 %v404
      %628 = vmatprep.subr.mxu0 %v403
      %629 = vmatpush1.msra.mxu0 %v402
      %630 = vmatprep.subr.mxu0 %v401
      %631 = vmatpush1.msra.mxu0 %v400
      %632 = vmatprep.subr.mxu0 %v399
      %633 = vmatpush1.msra.mxu0 %v398
      %634 = vmatprep.subr.mxu0 %v397
      %635 = vmatpush1.msra.mxu0 %v396
      %636 = vmatprep.subr.mxu0 %v395
      %637 = vmatpush1.msra.mxu0 %v394
      %638 = vmatprep.subr.mxu0 %v393
      %639 = vmatpush1.msra.mxu0 %v392
      %640 = vmatprep.subr.mxu0 %v391
      %641 = vmatpush1.msra.mxu0 %v390
      %642 = vmatprep.subr.mxu0 %v389
      %643 = vmatpush1.msra.mxu0 %v388
      %644 = vmatprep.subr.mxu0 %v387
      %645 = vmatpush1.msra.mxu0 %v386
      %646 = vmatprep.subr.mxu0 %v385
      %647 = vmatpush1.msra.mxu0 %v384
      %648 = vmatprep.subr.mxu0 %v383
      %649 = vmatpush1.msra.mxu0 %v382
      %650 = vmatprep.subr.mxu0 %v616
      %651 = vmatpush2.msra.mxu0 %v613
      %652 = vmatprep.subr.mxu0 %v443
      %653 = vmatpush2.msra.mxu0 %v442
      %654 = vmatprep.subr.mxu0 %v441
      %655 = vmatpush2.msra.mxu0 %v440
      %656 = vmatprep.subr.mxu0 %v439
      %657 = vmatpush2.msra.mxu0 %v438
      %658 = vmatprep.subr.mxu0 %v437
      %659 = vmatpush2.msra.mxu0 %v436
      %660 = vmatprep.subr.mxu0 %v435
      %661 = vmatpush2.msra.mxu0 %v434
      %662 = vmatprep.subr.mxu0 %v433
      %663 = vmatpush2.msra.mxu0 %v432
      %664 = vmatprep.subr.mxu0 %v431
      %665 = vmatpush2.msra.mxu0 %v430
      %666 = vmatprep.subr.mxu0 %v429
      %667 = vmatpush2.msra.mxu0 %v428
      %668 = vmatprep.subr.mxu0 %v427
      %669 = vmatpush2.msra.mxu0 %v426
      %670 = vmatprep.subr.mxu0 %v425
      %671 = vmatpush2.msra.mxu0 %v424
      %672 = vmatprep.subr.mxu0 %v423
      %673 = vmatpush2.msra.mxu0 %v422
      %674 = vmatprep.subr.mxu0 %v421
      %675 = vmatpush2.msra.mxu0 %v420
      %676 = vmatprep.subr.mxu0 %v419
      %677 = vmatpush2.msra.mxu0 %v418
      %678 = vmatprep.subr.mxu0 %v417
      %679 = vmatpush2.msra.mxu0 %v416
      %680 = vmatprep.subr.mxu0 %v415
      %681 = vmatpush2.msra.mxu0 %v414
      %682 = vmatprep.mubr.f32.mxu0 %v610
      %683 = vmatmul.mubr.f32.gmra.mxu0 %v607
      %v684 = vpop.f32.mrf.mxu0
      %v685 = vadd.f32 %v596, %v684
      %v686 = vpop.f32.mrf.mxu0
      %v687 = vadd.f32 %v598, %v686
      %688 = vdwg.mxu0
      %v690 = vlaneseq
      %v691 = vshrl.u32 %v690, 7
      %v692 = vsub.s32 0, %v691
      %v693 = vrot.slane %v381, %v692
      %v694 = vlaneseq
      %v695 = vshrl.u32 %v694, 7
      %v696 = vsub.s32 2, %v695
      %v697 = vrot.slane %v381, %v696
      %v700 = vlaneseq
      %v701 = vshrl.u32 %v700, 7
      %v702 = vsub.s32 0, %v701
      %v703 = vrot.slane %v693, %v702
      %v704 = vlaneseq
      %v705 = vshrl.u32 %v704, 7
      %v706 = vsub.s32 0, %v705
      %v707 = vrot.slane %v697, %v706
      %v708 = vmul.f32 %v363, %v703
      %v709 = vmul.f32 %v363, %v707
      %v710 = vadd.f32 %v685, %v708
      %v711 = vadd.f32 %v687, %v709
      %v712 = vlaneseq
      %v713 = vshrl.u32 %v712, 7
      %v714 = vsub.s32 1, %v713
      %v715 = vrot.slane %v381, %v714
      %v716 = vlaneseq
      %v717 = vshrl.u32 %v716, 7
      %v718 = vsub.s32 3, %v717
      %v719 = vrot.slane %v381, %v718
      %v722 = vlaneseq
      %v723 = vshrl.u32 %v722, 7
      %v724 = vsub.s32 1, %v723
      %v725 = vrot.slane %v715, %v724
      %v726 = vlaneseq
      %v727 = vshrl.u32 %v726, 7
      %v728 = vsub.s32 1, %v727
      %v729 = vrot.slane %v719, %v728
      %v730 = vmul.f32 %v380, %v725
      %v731 = vmul.f32 %v380, %v729
      %v732 = vadd.f32 %v710, %v730
      %v733 = vadd.f32 %v711, %v731
      %v734 = vld [vmem:[%s5] sm:$0x3]
      %v736 = vlaneseq
      %v737 = vshrl.u32 %v736, 7
      %v738 = vsub.s32 0, %v737
      %v739 = vrot.slane %v734, %v738
      %v740 = vlaneseq
      %v741 = vshrl.u32 %v740, 7
      %v742 = vsub.s32 1, %v741
      %v743 = vrot.slane %v734, %v742
      %v746 = vadd.f32 %v732, %v739
      %v747 = vadd.f32 %v733, %v743
      %v748 = vmax.f32 %v746, 0.0
      %v749 = vmax.f32 %v747, 0.0
      %v750 = vld [vmem:[%s6] sm:$0xff]
      %v751 = vld [vmem:[%s6 + $0x8] sm:$0xff]
      %v752 = vld [vmem:[%s6 + $0x10] sm:$0xff]
      %v753 = vld [vmem:[%s6 + $0x18] sm:$0xff]
      %v754 = vld [vmem:[%s6 + $0x20] sm:$0xff]
      %v755 = vld [vmem:[%s6 + $0x28] sm:$0xff]
      %v756 = vld [vmem:[%s6 + $0x30] sm:$0xff]
      %v757 = vld [vmem:[%s6 + $0x38] sm:$0xff]
      %v758 = vld [vmem:[%s6 + $0x40] sm:$0xff]
      %v759 = vld [vmem:[%s6 + $0x48] sm:$0xff]
      %v760 = vld [vmem:[%s6 + $0x50] sm:$0xff]
      %v761 = vld [vmem:[%s6 + $0x58] sm:$0xff]
      %v762 = vld [vmem:[%s6 + $0x60] sm:$0xff]
      %v763 = vld [vmem:[%s6 + $0x68] sm:$0xff]
      %v764 = vld [vmem:[%s6 + $0x70] sm:$0xff]
      %v765 = vld [vmem:[%s6 + $0x78] sm:$0xff]
      %v766 = vld [vmem:[%s6 + $0x80] sm:$0xff]
      %v767 = vld [vmem:[%s6 + $0x88] sm:$0xff]
      %v768 = vld [vmem:[%s6 + $0x90] sm:$0xff]
      %v769 = vld [vmem:[%s6 + $0x98] sm:$0xff]
      %v770 = vld [vmem:[%s6 + $0xa0] sm:$0xff]
      %v771 = vld [vmem:[%s6 + $0xa8] sm:$0xff]
      %v772 = vld [vmem:[%s6 + $0xb0] sm:$0xff]
      %v773 = vld [vmem:[%s6 + $0xb8] sm:$0xff]
      %v774 = vld [vmem:[%s6 + $0xc0] sm:$0xff]
      %v775 = vld [vmem:[%s6 + $0xc8] sm:$0xff]
      %v776 = vld [vmem:[%s6 + $0xd0] sm:$0xff]
      %v777 = vld [vmem:[%s6 + $0xd8] sm:$0xff]
      %v778 = vld [vmem:[%s6 + $0xe0] sm:$0xff]
      %v779 = vld [vmem:[%s6 + $0xe8] sm:$0xff]
      %v780 = vld [vmem:[%s6 + $0xf0] sm:$0xff]
      %v781 = vld [vmem:[%s6 + $0xf8] sm:$0xff]
      %v782 = vld [vmem:[%s7] sm:$0x1]
      %v784 = vlaneseq
      %v785 = vshrl.u32 %v784, 7
      %v786 = vsub.s32 0, %v785
      %v787 = vrot.slane %v782, %v786
      %789 = vmatprep.subr.mxu0 0.0
      %790 = vmatpush1.msra.mxu0 %v765
      %791 = vmatprep.subr.mxu0 0.0
      %792 = vmatpush1.msra.mxu0 %v764
      %793 = vmatprep.subr.mxu0 0.0
      %794 = vmatpush1.msra.mxu0 %v763
      %795 = vmatprep.subr.mxu0 0.0
      %796 = vmatpush1.msra.mxu0 %v762
      %797 = vmatprep.subr.mxu0 0.0
      %798 = vmatpush1.msra.mxu0 %v761
      %799 = vmatprep.subr.mxu0 0.0
      %800 = vmatpush1.msra.mxu0 %v760
      %801 = vmatprep.subr.mxu0 0.0
      %802 = vmatpush1.msra.mxu0 %v759
      %803 = vmatprep.subr.mxu0 0.0
      %804 = vmatpush1.msra.mxu0 %v758
      %805 = vmatprep.subr.mxu0 0.0
      %806 = vmatpush1.msra.mxu0 %v757
      %807 = vmatprep.subr.mxu0 0.0
      %808 = vmatpush1.msra.mxu0 %v756
      %809 = vmatprep.subr.mxu0 0.0
      %810 = vmatpush1.msra.mxu0 %v755
      %811 = vmatprep.subr.mxu0 0.0
      %812 = vmatpush1.msra.mxu0 %v754
      %813 = vmatprep.subr.mxu0 0.0
      %814 = vmatpush1.msra.mxu0 %v753
      %815 = vmatprep.subr.mxu0 0.0
      %816 = vmatpush1.msra.mxu0 %v752
      %817 = vmatprep.subr.mxu0 0.0
      %818 = vmatpush1.msra.mxu0 %v751
      %819 = vmatprep.subr.mxu0 0.0
      %820 = vmatpush1.msra.mxu0 %v750
      %821 = vmatprep.subr.mxu0 0.0
      %822 = vmatpush2.msra.mxu0 %v781
      %823 = vmatprep.subr.mxu0 0.0
      %824 = vmatpush2.msra.mxu0 %v780
      %825 = vmatprep.subr.mxu0 0.0
      %826 = vmatpush2.msra.mxu0 %v779
      %827 = vmatprep.subr.mxu0 0.0
      %828 = vmatpush2.msra.mxu0 %v778
      %829 = vmatprep.subr.mxu0 0.0
      %830 = vmatpush2.msra.mxu0 %v777
      %831 = vmatprep.subr.mxu0 0.0
      %832 = vmatpush2.msra.mxu0 %v776
      %833 = vmatprep.subr.mxu0 0.0
      %834 = vmatpush2.msra.mxu0 %v775
      %835 = vmatprep.subr.mxu0 0.0
      %836 = vmatpush2.msra.mxu0 %v774
      %837 = vmatprep.subr.mxu0 0.0
      %838 = vmatpush2.msra.mxu0 %v773
      %839 = vmatprep.subr.mxu0 0.0
      %840 = vmatpush2.msra.mxu0 %v772
      %841 = vmatprep.subr.mxu0 0.0
      %842 = vmatpush2.msra.mxu0 %v771
      %843 = vmatprep.subr.mxu0 0.0
      %844 = vmatpush2.msra.mxu0 %v770
      %845 = vmatprep.subr.mxu0 0.0
      %846 = vmatpush2.msra.mxu0 %v769
      %847 = vmatprep.subr.mxu0 0.0
      %848 = vmatpush2.msra.mxu0 %v768
      %849 = vmatprep.subr.mxu0 0.0
      %850 = vmatpush2.msra.mxu0 %v767
      %851 = vmatprep.subr.mxu0 0.0
      %852 = vmatpush2.msra.mxu0 %v766
      %853 = vmatprep.mubr.f32.mxu0 %v749
      %854 = vmatmul.mubr.f32.gmra.mxu0 %v748
      %v855 = vpop.f32.mrf.mxu0
      %v856 = vadd.f32 %v787, %v855
      %v857 = vpop.f32.mrf.mxu0
      %858 = vdwg.mxu0
      %vm859 = vcmask 25600
      %v860 = vsel %vm859, %v856, -inf
      %861 = vmax.xlane.f32.xlu0 %v860
      %v862 = vpop.xlane.xlu0 %861
      %v863 = vsub.f32 %v856, %v862
      %v864 = vmul.f32 %v863, 1.442695
      %v865 = vpow.pop %v864
      %v866 = vsel %vm859, %v865, 0.0
      %867 = vadd.xlane.f32.xlu0 %v866
      %v868 = vpop.xlane.xlu0 %867
      %v869 = vrcp.pop %v868
      %v870 = vmul.f32 %v865, %v869
      %v871 = vsel %vm859, %v870, 0.0
      %v872 = vrot.slane %v871, 4
      %v873 = vadd.f32 %v871, %v872
      %v874 = vrot.slane %v873, 2
      %v875 = vadd.f32 %v873, %v874
      %v876 = vrot.slane %v875, 1
      %v877 = vadd.f32 %v875, %v876
      %v878 = vrcp.pop 2.0
      %v879 = vmul.f32 %v877, %v878
      %v880 = vld [vmem:[%s8] sm:$0x1]
      %v881 = vmul.f32 %v879, %v880
      %vm882 = vcmask 24576
      %v883 = vsel %vm882, %v881, 0.0
      %884 = vadd.xlane.f32.xlu0 %v883
      %v885 = vpop.xlane.xlu0 %884
      %vm886 = vcmask 0
      %887 = vst.msk [vmem:[#allocation11] sm:$0x1] %vm886, %v885
    $region53: #{tpu_custom_call.1} parent=1 // pred_fallthru
      _
    // Predicated region
    $region54: #{tpu_custom_call.1} parent=1 // pred_check
      _
    $region55: #{tpu_custom_call.1} parent=1 // pred_check_branch
      %889 = sbr.rel (0) target = $region57
    $region56: #{tpu_custom_call.1} parent=1 // pred_region
      %s891 = ssub.s32 16, 16
      %892 = vsyncadd [#allocation8], %s891
      %s894 = sshll.u32 [#allocation11], 4
      %s895 = int_to_ptr.vmem [resolvable:$true] %s894
      %897 = dma.vmem_to_hbm [thread:$0]  %s895, 16, %s9, [#allocation8]
    $region57: #{tpu_custom_call.1} parent=1 // pred_fallthru
      _
    // Predicated region
    $region58: #{tpu_custom_call.1} parent=1 // pred_check
      _
    $region59: #{tpu_custom_call.1} parent=1 // pred_check_branch
      %899 = sbr.rel (0) target = $region61
    $region60: #{tpu_custom_call.1} parent=1 // pred_region
      %900 = dma.done [#allocation8], 16
    $region61: #{tpu_custom_call.1} parent=1 // pred_fallthru
      _
    %901 = vsyncpa [#allocation7], 1
    %902 = vsyncpa [#allocation10], 1
    %903 = vsyncpa [#allocation8], 1

</llo_original>
